<compile_context>
chip_gen: v7x
topology: tpu7x:2x2x1
jax: 0.10.0
libtpu: 0.0.40
codegen_flags: <defaults>
</compile_context>

<pallas_src>
import math

import jax
import jax.numpy as jnp
from jax.experimental import pallas as pl
from jax.experimental.pallas import tpu as pltpu


def _make_kernel(k):
    if k > 1:
        def kernel(x_ref, expand_ref, freq_ref, bias_ref, out_ref):
            # x_ref:      (tile_r, k)      f32  -- k original rows packed per row
            # expand_ref: (k, k*dim)       f32  -- exact 0/1 block-diagonal expansion
            # freq_ref:   (1, k*dim)       f32  -- [freqs, freqs] tiled k times
            # bias_ref:   (1, k*dim)       f32  -- [0.., pi/2..] tiled k times
            # out_ref:    (tile_r, k*dim)  f32
            xs = x_ref[...] * 1000.0                      # match reference ordering
            # Exact lane expansion on the idle MXU: multiplying by 0/1 at HIGHEST
            # precision reproduces xs bit-exactly in every group of dim lanes.
            x_exp = jnp.dot(xs, expand_ref[...],
                            precision=jax.lax.Precision.HIGHEST,
                            preferred_element_type=jnp.float32)
            out_ref[...] = jnp.sin(x_exp * freq_ref[...] + bias_ref[...])
    else:
        def kernel(x_ref, expand_ref, freq_ref, bias_ref, out_ref):
            # Fallback (dim >= 128 or 128 % dim != 0): plain broadcast, still a
            # single full-width sin with the pi/2 bias (no concatenate).
            xs = x_ref[...] * 1000.0                      # (tile_r, 1)
            out_ref[...] = jnp.sin(xs * freq_ref[...] + bias_ref[...])
    return kernel


def sinusoidal_pos_emb(x, dim):
    """Pallas implementation of SinusoidalPosEmb.forward.

    x: array whose flattened form is (N,) (the torch module squeezes).
    Returns (N, dim) float32, columns [sin | cos], matching
    torch.cat((emb.sin(), emb.cos()), dim=-1).
    """
    assert dim % 2 == 0 and dim >= 4, "dim must be even and >= 4"
    x = jnp.reshape(x, (-1,)).astype(jnp.float32)   # robust squeeze (works for N==1)
    n = x.shape[0]
    half_dim = dim // 2

    # Frequency table WITHOUT the 1000x folded in (ordering matches the module).
    scale = math.log(10000.0) / (half_dim - 1)
    freqs = jnp.exp(jnp.arange(half_dim, dtype=jnp.float32) * -scale)   # (half_dim,)

    # Lane-packing factor: k original rows per 128-lane vector row.
    k = 128 // dim if (dim < 128 and 128 % dim == 0) else 1
    width = k * dim

    # Pad N up to a multiple of k (free view afterwards; padded rows sliced off).
    n_pad = ((n + k - 1) // k) * k
    if n_pad != n:
        x = jnp.pad(x, (0, n_pad - n))
    R = n_pad // k
    x2 = x.reshape(R, k)

    # Resident constants.
    freq_row = jnp.concatenate([freqs, freqs])                            # (dim,)
    bias_row = jnp.concatenate([jnp.zeros((half_dim,), jnp.float32),
                                jnp.full((half_dim,), math.pi / 2,
                                         dtype=jnp.float32)])             # (dim,)
    freq_full = jnp.tile(freq_row, (k,)).reshape(1, width)
    bias_full = jnp.tile(bias_row, (k,)).reshape(1, width)
    # 0/1 block-diagonal expansion matrix: row j is 1 on lanes [j*dim, (j+1)*dim).
    expand = jnp.repeat(jnp.eye(k, dtype=jnp.float32), dim, axis=1)       # (k, width)

    # --- Tile sizing (dim-aware, VMEM- and megacore-aware) ---------------------
    row_bytes = width * 4
    target_block_bytes = 4 * 1024 * 1024                  # ~4 MB output block
    tile_r = max(1, target_block_bytes // row_bytes)
    if R >= 32:                                            # enough work: want >=4 steps
        tile_r = min(tile_r, pl.cdiv(R, 4))                # >=2 steps per TC on v7x
    if tile_r >= R:
        tile_r = R                                         # full-extent block is legal
    else:
        tile_r = max(8, (tile_r // 8) * 8)                 # (8,128) rule
    grid = (pl.cdiv(R, tile_r),)

    cost = pl.CostEstimate(
        flops=int(R * width * 20 + 2 * R * k * width),     # sin poly + muls + expansion
        transcendentals=int(R * width),                    # one sin per output element
        bytes_accessed=int(4 * (R * width + R * k + k * width + 2 * width)),
    )

    out_packed = pl.pallas_call(
        _make_kernel(k),
        out_shape=jax.ShapeDtypeStruct((R, width), jnp.float32),
        grid=grid,
        in_specs=[
            pl.BlockSpec((tile_r, k), lambda i: (i, 0)),
            # Constant blocks: same block index every step -> stay resident in VMEM.
            pl.BlockSpec((k, width), lambda i: (0, 0)),
            pl.BlockSpec((1, width), lambda i: (0, 0)),
            pl.BlockSpec((1, width), lambda i: (0, 0)),
        ],
        out_specs=pl.BlockSpec((tile_r, width), lambda i: (i, 0)),
        compiler_params=pltpu.CompilerParams(
            dimension_semantics=("parallel",),             # shard tiles over TCs on v7x
            vmem_limit_bytes=32 * 1024 * 1024,             # fits v5e/v6e/v7x comfortably
        ),
        cost_estimate=cost,
    )(x2, expand, freq_full, bias_full)

    out = out_packed.reshape(n_pad, dim)                   # free row-major view
    if n_pad != n:
        out = out[:n]
    return out


def _reference(x, dim):
    # Pure-JAX reference mirroring the PyTorch module exactly.
    x = jnp.reshape(x, (-1,)).astype(jnp.float32) * 1000.0
    half_dim = dim // 2
    emb = math.log(10000.0) / (half_dim - 1)
    emb = jnp.exp(jnp.arange(half_dim, dtype=jnp.float32) * -emb)
    emb = x[:, None] * emb[None, :]
    return jnp.concatenate([jnp.sin(emb), jnp.cos(emb)], axis=-1)


if __name__ == "__main__":
    key = jax.random.PRNGKey(0)
    N, DIM = 8, 32  # small batch of time scalars, embedding dim 32
    # Input shaped (N, 1) so squeezing/flattening yields the 1-D vector the
    # PyTorch module expects.
    x = jax.random.uniform(key, (N, 1), dtype=jnp.float32)

    out = jax.block_until_ready(sinusoidal_pos_emb(x, DIM))
    ref = _reference(x, DIM)
    assert out.shape == (N, DIM), out.shape
    # Tolerance rationale: phases reach ~1e3, so cos(p)=sin(p+pi/2) rounding and
    # sin-implementation differences contribute up to ~1e-4 absolute on O(1) outputs.
    assert jnp.allclose(out, ref, atol=5e-4, rtol=5e-4), "mismatch vs reference"

    # Exercise the multi-step grid, the k-packing padding, and the ragged last tile.
    N2 = 4096 * 2 + 41  # not a multiple of k=4 nor of the row tile
    x2 = jax.random.uniform(jax.random.PRNGKey(1), (N2,), dtype=jnp.float32)
    out2 = jax.block_until_ready(sinusoidal_pos_emb(x2, DIM))
    ref2 = _reference(x2, DIM)
    assert out2.shape == (N2, DIM), out2.shape
    assert jnp.allclose(out2, ref2, atol=5e-4, rtol=5e-4), "mismatch vs reference (tiled)"

    print("KERNEL_OK")
</pallas_src>

<mosaic_0001>
module attributes {stable_mosaic.version = 11 : i64} {
  func.func @kernel(%arg0: i32, %arg1: memref<2x4xf32, #tpu.memory_space<vmem>>, %arg2: memref<4x128xf32, #tpu.memory_space<vmem>>, %arg3: memref<1x128xf32, #tpu.memory_space<vmem>>, %arg4: memref<1x128xf32, #tpu.memory_space<vmem>>, %arg5: memref<2x128xf32, #tpu.memory_space<vmem>>) attributes {dimension_semantics = [#tpu.dimension_semantics<parallel>], iteration_bounds = array<i64: 1>, scalar_prefetch = 0 : i64, scratch_operands = 0 : i64, tpu.core_type = #tpu.core_type<tc>, window_params = [{transform_indices = @transform_0, window_bounds = array<i64: 2, 4>}, {pipeline_mode = #tpu.pipeline_mode<synchronous>, transform_indices = @transform_1, window_bounds = array<i64: 4, 128>}, {pipeline_mode = #tpu.pipeline_mode<synchronous>, transform_indices = @transform_2, window_bounds = array<i64: 1, 128>}, {pipeline_mode = #tpu.pipeline_mode<synchronous>, transform_indices = @transform_3, window_bounds = array<i64: 1, 128>}, {transform_indices = @transform_4, window_bounds = array<i64: 2, 128>}]} {
    %c0 = arith.constant 0 : index
    %c0_0 = arith.constant 0 : index
    %0 = vector.load %arg1[%c0, %c0_0] : memref<2x4xf32, #tpu.memory_space<vmem>>, vector<2x4xf32>
    %cst = arith.constant 1.000000e+03 : f32
    %1 = vector.broadcast %cst : f32 to vector<2x4xf32>
    %2 = arith.mulf %0, %1 : vector<2x4xf32>
    %c0_1 = arith.constant 0 : index
    %c0_2 = arith.constant 0 : index
    %3 = vector.load %arg2[%c0_1, %c0_2] : memref<4x128xf32, #tpu.memory_space<vmem>>, vector<4x128xf32>
    %cst_3 = arith.constant dense<0.000000e+00> : vector<2x128xf32>
    %4 = tpu.matmul %2, %3, %cst_3 {dimension_numbers = #tpu.dot_dimension_numbers<[1], [0], [0], [1], [0, 0, 1, 1], [], []>, precision = #tpu.contract_precision<fp32>} : vector<2x4xf32>, vector<4x128xf32>, vector<2x128xf32> -> vector<2x128xf32>
    %c0_4 = arith.constant 0 : index
    %c0_5 = arith.constant 0 : index
    %5 = vector.load %arg3[%c0_4, %c0_5] : memref<1x128xf32, #tpu.memory_space<vmem>>, vector<1x128xf32>
    %6 = vector.broadcast %5 : vector<1x128xf32> to vector<2x128xf32>
    %7 = arith.mulf %4, %6 : vector<2x128xf32>
    %c0_6 = arith.constant 0 : index
    %c0_7 = arith.constant 0 : index
    %8 = vector.load %arg4[%c0_6, %c0_7] : memref<1x128xf32, #tpu.memory_space<vmem>>, vector<1x128xf32>
    %9 = vector.broadcast %8 : vector<1x128xf32> to vector<2x128xf32>
    %10 = arith.addf %7, %9 : vector<2x128xf32>
    %11 = math.sin %10 : vector<2x128xf32>
    %c0_8 = arith.constant 0 : index
    %c0_9 = arith.constant 0 : index
    %12 = vector.load %arg5[%c0_8, %c0_9] : memref<2x128xf32, #tpu.memory_space<vmem>>, vector<2x128xf32>
    tpu.vector_store %arg5[%c0_8, %c0_9], %11 {strides = array<i32>} : memref<2x128xf32, #tpu.memory_space<vmem>>, vector<2x128xf32>,
    return
  }
  func.func @transform_0(%arg0: i32) -> (i32, i32) {
    %c0_i32 = arith.constant 0 : i32
    %c0_i32_0 = arith.constant 0 : i32
    return %arg0, %c0_i32 : i32, i32
  }
  func.func @transform_1(%arg0: i32) -> (i32, i32) {
    %c0_i32 = arith.constant 0 : i32
    %c0_i32_0 = arith.constant 0 : i32
    %c0_i32_1 = arith.constant 0 : i32
    return %c0_i32, %c0_i32_0 : i32, i32
  }
  func.func @transform_2(%arg0: i32) -> (i32, i32) {
    %c0_i32 = arith.constant 0 : i32
    %c0_i32_0 = arith.constant 0 : i32
    %c0_i32_1 = arith.constant 0 : i32
    return %c0_i32, %c0_i32_0 : i32, i32
  }
  func.func @transform_3(%arg0: i32) -> (i32, i32) {
    %c0_i32 = arith.constant 0 : i32
    %c0_i32_0 = arith.constant 0 : i32
    %c0_i32_1 = arith.constant 0 : i32
    return %c0_i32, %c0_i32_0 : i32, i32
  }
  func.func @transform_4(%arg0: i32) -> (i32, i32) {
    %c0_i32 = arith.constant 0 : i32
    %c0_i32_0 = arith.constant 0 : i32
    return %arg0, %c0_i32 : i32, i32
  }
}

</mosaic_0001>

<llo_original>
// kernel: tpu_custom_call.1
$region0: #{tpu_custom_call.1}
  #allocation0 [shape = 'u32[]', space=smem, size = 0x4, offset = 0x4, fixed_abs, tag = 'smem constant byte address 0x4 - core index']
  #allocation1 [shape = 'u32[144,128]{1,0:T(1,128)}', space=vmem, size = 0x12000, scoped, tag = 'internal scratch']
  %s0 = inlined_call_operand.hbm [shape: f32[2,4], index: 0, kind: input, shape index: {}]
  %s1 = inlined_call_operand.hbm [shape: f32[4,128], index: 1, kind: input, shape index: {}]
  %s2 = inlined_call_operand.vmem [shape: f32[1,128], index: 2, kind: input, shape index: {}]
  %s3 = inlined_call_operand.vmem [shape: f32[1,128], index: 3, kind: input, shape index: {}]
  %s4 = inlined_call_operand.hbm [shape: f32[2,128], index: 4, kind: output, shape index: {}]
  %s5 = sld [smem:[#allocation0]]
  $region34: #{tpu_custom_call.1} parent=0
    _
  %s7 = ssub.s32 1, %s5
  %s8 = scalar_select 0, %s7, %s5
  $region1: #{tpu_custom_call.1} parent=0
    #allocation2 [shape = 'u8[1024]{0}', space=vmem, size = 0x400, scoped, tag = 'input window, operand 0, single buffered']
    #allocation3 [shape = 's32[1]{0}', space=sflag, size = 0x4, scoped, tag = 'scoped memory for tpu_custom_call.1']
    #allocation4 [shape = 's32[1]{0}', space=sflag, size = 0x4, scoped, tag = 'scoped memory for tpu_custom_call.1']
    #allocation5 [shape = 'u8[2048]{0}', space=vmem, size = 0x800, scoped, tag = 'input window, operand 1, single buffered']
    #allocation6 [shape = 's32[1]{0}', space=sflag, size = 0x4, scoped, tag = 'scoped memory for tpu_custom_call.1']
    #allocation7 [shape = 'u8[1024]{0}', space=vmem, size = 0x400, scoped, tag = 'output window, operand 0, single buffered']
    %9 = vsyncpa [#allocation3], 0
    %10 = vsyncpa [#allocation6], 0
    %11 = vsyncpa [#allocation4], 0
    // Predicated region
    $region2: #{tpu_custom_call.1} parent=1 // pred_check
      _
    $region3: #{tpu_custom_call.1} parent=1 // pred_check_branch
      %13 = sbr.rel (0) target = $region5
    $region4: #{tpu_custom_call.1} parent=1 // pred_region
      %s15 = ssub.s32 32, 32
      %16 = vsyncadd [#allocation3], %s15
      %s18 = sshll.u32 [#allocation2], 4
      %s19 = int_to_ptr.vmem [resolvable:$true] %s18
      %21 = dma.hbm_to_vmem [thread:$0]  %s0, 32, %s19, [#allocation3]
    $region5: #{tpu_custom_call.1} parent=1 // pred_fallthru
      _
    // Predicated region
    $region6: #{tpu_custom_call.1} parent=1 // pred_check
      _
    $region7: #{tpu_custom_call.1} parent=1 // pred_check_branch
      %23 = sbr.rel (0) target = $region9
    $region8: #{tpu_custom_call.1} parent=1 // pred_region
      %s25 = ssub.s32 64, 64
      %26 = vsyncadd [#allocation6], %s25
      %s28 = sshll.u32 [#allocation5], 4
      %s29 = int_to_ptr.vmem [resolvable:$true] %s28
      %31 = dma.hbm_to_vmem [thread:$0]  %s1, 64, %s29, [#allocation6]
    $region9: #{tpu_custom_call.1} parent=1 // pred_fallthru
      _
    // Predicated region
    $region10: #{tpu_custom_call.1} parent=1 // pred_check
      _
    $region11: #{tpu_custom_call.1} parent=1 // pred_check_branch
      %33 = sbr.rel (0) target = $region13
    $region12: #{tpu_custom_call.1} parent=1 // pred_region
      _
    $region13: #{tpu_custom_call.1} parent=1 // pred_fallthru
      _
    // Predicated region
    $region14: #{tpu_custom_call.1} parent=1 // pred_check
      _
    $region15: #{tpu_custom_call.1} parent=1 // pred_check_branch
      %35 = sbr.rel (0) target = $region17
    $region16: #{tpu_custom_call.1} parent=1 // pred_region
      _
    $region17: #{tpu_custom_call.1} parent=1 // pred_fallthru
      _
    // Predicated region
    $region18: #{tpu_custom_call.1} parent=1 // pred_check
      _
    $region19: #{tpu_custom_call.1} parent=1 // pred_check_branch
      %37 = sbr.rel (0) target = $region21
    $region20: #{tpu_custom_call.1} parent=1 // pred_region
      %38 = dma.done [#allocation3], 32
    $region21: #{tpu_custom_call.1} parent=1 // pred_fallthru
      _
    // Predicated region
    $region22: #{tpu_custom_call.1} parent=1 // pred_check
      _
    $region23: #{tpu_custom_call.1} parent=1 // pred_check_branch
      %40 = sbr.rel (0) target = $region25
    $region24: #{tpu_custom_call.1} parent=1 // pred_region
      %41 = dma.done [#allocation6], 64
    $region25: #{tpu_custom_call.1} parent=1 // pred_fallthru
      _
    %v42 = vld [vmem:[#allocation2] sm:$0x3]
    %v43 = vmul.f32 %v42, 1000.0
    %v44 = vld [vmem:[#allocation5] sm:$0xf]
    %vm45 = vcmask 31744
    %v47 = vsel %vm45, %v43, 0
    %vm49 = vcmask 1043456
    %v51 = vsel %vm49, %v44, 0
    %53 = vmatprep.subr.mxu0 0.0
    %v54 = vand.u32 %v51, 4294901760
    %55 = vmatpush1.msra.mxu0 %v54
    %56 = vmatprep.subr.mxu0 0.0
    %57 = vmatpush1.msra.mxu0 0.0
    %58 = vmatprep.subr.mxu0 0.0
    %59 = vmatpush1.msra.mxu0 0.0
    %60 = vmatprep.subr.mxu0 0.0
    %61 = vmatpush1.msra.mxu0 0.0
    %62 = vmatprep.subr.mxu0 0.0
    %63 = vmatpush1.msra.mxu0 0.0
    %64 = vmatprep.subr.mxu0 0.0
    %65 = vmatpush1.msra.mxu0 0.0
    %66 = vmatprep.subr.mxu0 0.0
    %67 = vmatpush1.msra.mxu0 0.0
    %68 = vmatprep.subr.mxu0 0.0
    %69 = vmatpush1.msra.mxu0 0.0
    %70 = vmatprep.subr.mxu0 0.0
    %71 = vmatpush1.msra.mxu0 0.0
    %72 = vmatprep.subr.mxu0 0.0
    %73 = vmatpush1.msra.mxu0 0.0
    %74 = vmatprep.subr.mxu0 0.0
    %75 = vmatpush1.msra.mxu0 0.0
    %76 = vmatprep.subr.mxu0 0.0
    %77 = vmatpush1.msra.mxu0 0.0
    %78 = vmatprep.subr.mxu0 0.0
    %79 = vmatpush1.msra.mxu0 0.0
    %80 = vmatprep.subr.mxu0 0.0
    %81 = vmatpush1.msra.mxu0 0.0
    %82 = vmatprep.subr.mxu0 0.0
    %83 = vmatpush1.msra.mxu0 0.0
    %84 = vmatprep.subr.mxu0 0.0
    %85 = vmatpush1.msra.mxu0 0.0
    %86 = vmatprep.subr.mxu0 0.0
    %87 = vmatpush1.msra.mxu0 0.0
    %88 = vmatprep.subr.mxu0 0.0
    %89 = vmatpush1.msra.mxu0 0.0
    %90 = vmatprep.subr.mxu0 0.0
    %91 = vmatpush1.msra.mxu0 0.0
    %92 = vmatprep.subr.mxu0 0.0
    %93 = vmatpush1.msra.mxu0 0.0
    %94 = vmatprep.subr.mxu0 0.0
    %95 = vmatpush1.msra.mxu0 0.0
    %96 = vmatprep.subr.mxu0 0.0
    %97 = vmatpush1.msra.mxu0 0.0
    %98 = vmatprep.subr.mxu0 0.0
    %99 = vmatpush1.msra.mxu0 0.0
    %100 = vmatprep.subr.mxu0 0.0
    %101 = vmatpush1.msra.mxu0 0.0
    %102 = vmatprep.subr.mxu0 0.0
    %103 = vmatpush1.msra.mxu0 0.0
    %104 = vmatprep.subr.mxu0 0.0
    %105 = vmatpush1.msra.mxu0 0.0
    %106 = vmatprep.subr.mxu0 0.0
    %107 = vmatpush1.msra.mxu0 0.0
    %108 = vmatprep.subr.mxu0 0.0
    %109 = vmatpush1.msra.mxu0 0.0
    %110 = vmatprep.subr.mxu0 0.0
    %111 = vmatpush1.msra.mxu0 0.0
    %112 = vmatprep.subr.mxu0 0.0
    %113 = vmatpush1.msra.mxu0 0.0
    %114 = vmatprep.subr.mxu0 0.0
    %115 = vmatpush1.msra.mxu0 0.0
    %116 = vmatprep.subr.mxu0 0.0
    %117 = vmatpush1.msra.mxu0 0.0
    %118 = vmatprep.mubr.f32.mxu0 0.0
    %v119 = vand.u32 %v47, 4294901760
    %v120 = vsub.f32 %v47, %v119
    %v121 = vand.u32 %v120, 4294901760
    %v122 = vsub.f32 %v120, %v121
    %v123 = vand.u32 %v122, 4294901760
    %124 = vmatmul.mubr.f32.gmra.mrb[0].mxu0 %v123
    %v125 = vpop.f32.mrb[0].mxu0
    %v126 = vadd.f32 0.0, %v125
    %v127 = vpop.f32.mrb[0].mxu0
    %128 = vdwg.mxu0
    %129 = vmatprep.subr.mxu0 0.0
    %v130 = vand.u32 %v51, 4294901760
    %v131 = vsub.f32 %v51, %v130
    %v132 = vand.u32 %v131, 4294901760
    %v133 = vsub.f32 %v131, %v132
    %v134 = vand.u32 %v133, 4294901760
    %135 = vmatpush1.msra.mxu0 %v134
    %136 = vmatprep.subr.mxu0 0.0
    %137 = vmatpush1.msra.mxu0 0.0
    %138 = vmatprep.subr.mxu0 0.0
    %139 = vmatpush1.msra.mxu0 0.0
    %140 = vmatprep.subr.mxu0 0.0
    %141 = vmatpush1.msra.mxu0 0.0
    %142 = vmatprep.subr.mxu0 0.0
    %143 = vmatpush1.msra.mxu0 0.0
    %144 = vmatprep.subr.mxu0 0.0
    %145 = vmatpush1.msra.mxu0 0.0
    %146 = vmatprep.subr.mxu0 0.0
    %147 = vmatpush1.msra.mxu0 0.0
    %148 = vmatprep.subr.mxu0 0.0
    %149 = vmatpush1.msra.mxu0 0.0
    %150 = vmatprep.subr.mxu0 0.0
    %151 = vmatpush1.msra.mxu0 0.0
    %152 = vmatprep.subr.mxu0 0.0
    %153 = vmatpush1.msra.mxu0 0.0
    %154 = vmatprep.subr.mxu0 0.0
    %155 = vmatpush1.msra.mxu0 0.0
    %156 = vmatprep.subr.mxu0 0.0
    %157 = vmatpush1.msra.mxu0 0.0
    %158 = vmatprep.subr.mxu0 0.0
    %159 = vmatpush1.msra.mxu0 0.0
    %160 = vmatprep.subr.mxu0 0.0
    %161 = vmatpush1.msra.mxu0 0.0
    %162 = vmatprep.subr.mxu0 0.0
    %163 = vmatpush1.msra.mxu0 0.0
    %164 = vmatprep.subr.mxu0 0.0
    %165 = vmatpush1.msra.mxu0 0.0
    %166 = vmatprep.subr.mxu0 0.0
    %167 = vmatpush1.msra.mxu0 0.0
    %168 = vmatprep.subr.mxu0 0.0
    %169 = vmatpush1.msra.mxu0 0.0
    %170 = vmatprep.subr.mxu0 0.0
    %171 = vmatpush1.msra.mxu0 0.0
    %172 = vmatprep.subr.mxu0 0.0
    %173 = vmatpush1.msra.mxu0 0.0
    %174 = vmatprep.subr.mxu0 0.0
    %175 = vmatpush1.msra.mxu0 0.0
    %176 = vmatprep.subr.mxu0 0.0
    %177 = vmatpush1.msra.mxu0 0.0
    %178 = vmatprep.subr.mxu0 0.0
    %179 = vmatpush1.msra.mxu0 0.0
    %180 = vmatprep.subr.mxu0 0.0
    %181 = vmatpush1.msra.mxu0 0.0
    %182 = vmatprep.subr.mxu0 0.0
    %183 = vmatpush1.msra.mxu0 0.0
    %184 = vmatprep.subr.mxu0 0.0
    %185 = vmatpush1.msra.mxu0 0.0
    %186 = vmatprep.subr.mxu0 0.0
    %187 = vmatpush1.msra.mxu0 0.0
    %188 = vmatprep.subr.mxu0 0.0
    %189 = vmatpush1.msra.mxu0 0.0
    %190 = vmatprep.subr.mxu0 0.0
    %191 = vmatpush1.msra.mxu0 0.0
    %192 = vmatprep.subr.mxu0 0.0
    %193 = vmatpush1.msra.mxu0 0.0
    %194 = vmatprep.subr.mxu0 0.0
    %195 = vmatpush1.msra.mxu0 0.0
    %196 = vmatprep.subr.mxu0 0.0
    %197 = vmatpush1.msra.mxu0 0.0
    %198 = vmatprep.mubr.f32.mxu0 0.0
    %v199 = vand.u32 %v47, 4294901760
    %200 = vmatmul.mubr.f32.gmra.mrb[0].mxu0 %v199
    %v201 = vpop.f32.mrb[0].mxu0
    %v202 = vadd.f32 %v126, %v201
    %v203 = vpop.f32.mrb[0].mxu0
    %204 = vdwg.mxu0
    %205 = vmatprep.subr.mxu0 0.0
    %v206 = vand.u32 %v51, 4294901760
    %v207 = vsub.f32 %v51, %v206
    %208 = vmatpush1.msra.mxu0 %v207
    %209 = vmatprep.subr.mxu0 0.0
    %210 = vmatpush1.msra.mxu0 0.0
    %211 = vmatprep.subr.mxu0 0.0
    %212 = vmatpush1.msra.mxu0 0.0
    %213 = vmatprep.subr.mxu0 0.0
    %214 = vmatpush1.msra.mxu0 0.0
    %215 = vmatprep.subr.mxu0 0.0
    %216 = vmatpush1.msra.mxu0 0.0
    %217 = vmatprep.subr.mxu0 0.0
    %218 = vmatpush1.msra.mxu0 0.0
    %219 = vmatprep.subr.mxu0 0.0
    %220 = vmatpush1.msra.mxu0 0.0
    %221 = vmatprep.subr.mxu0 0.0
    %222 = vmatpush1.msra.mxu0 0.0
    %223 = vmatprep.subr.mxu0 0.0
    %224 = vmatpush1.msra.mxu0 0.0
    %225 = vmatprep.subr.mxu0 0.0
    %226 = vmatpush1.msra.mxu0 0.0
    %227 = vmatprep.subr.mxu0 0.0
    %228 = vmatpush1.msra.mxu0 0.0
    %229 = vmatprep.subr.mxu0 0.0
    %230 = vmatpush1.msra.mxu0 0.0
    %231 = vmatprep.subr.mxu0 0.0
    %232 = vmatpush1.msra.mxu0 0.0
    %233 = vmatprep.subr.mxu0 0.0
    %234 = vmatpush1.msra.mxu0 0.0
    %235 = vmatprep.subr.mxu0 0.0
    %236 = vmatpush1.msra.mxu0 0.0
    %237 = vmatprep.subr.mxu0 0.0
    %238 = vmatpush1.msra.mxu0 0.0
    %239 = vmatprep.subr.mxu0 0.0
    %240 = vmatpush1.msra.mxu0 0.0
    %241 = vmatprep.subr.mxu0 0.0
    %242 = vmatpush1.msra.mxu0 0.0
    %243 = vmatprep.subr.mxu0 0.0
    %244 = vmatpush1.msra.mxu0 0.0
    %245 = vmatprep.subr.mxu0 0.0
    %246 = vmatpush1.msra.mxu0 0.0
    %247 = vmatprep.subr.mxu0 0.0
    %248 = vmatpush1.msra.mxu0 0.0
    %249 = vmatprep.subr.mxu0 0.0
    %250 = vmatpush1.msra.mxu0 0.0
    %251 = vmatprep.subr.mxu0 0.0
    %252 = vmatpush1.msra.mxu0 0.0
    %253 = vmatprep.subr.mxu0 0.0
    %254 = vmatpush1.msra.mxu0 0.0
    %255 = vmatprep.subr.mxu0 0.0
    %256 = vmatpush1.msra.mxu0 0.0
    %257 = vmatprep.subr.mxu0 0.0
    %258 = vmatpush1.msra.mxu0 0.0
    %259 = vmatprep.subr.mxu0 0.0
    %260 = vmatpush1.msra.mxu0 0.0
    %261 = vmatprep.subr.mxu0 0.0
    %262 = vmatpush1.msra.mxu0 0.0
    %263 = vmatprep.subr.mxu0 0.0
    %264 = vmatpush1.msra.mxu0 0.0
    %265 = vmatprep.subr.mxu0 0.0
    %266 = vmatpush1.msra.mxu0 0.0
    %267 = vmatprep.subr.mxu0 0.0
    %268 = vmatpush1.msra.mxu0 0.0
    %269 = vmatprep.subr.mxu0 0.0
    %270 = vmatpush1.msra.mxu0 0.0
    %271 = vmatprep.mubr.f32.mxu0 0.0
    %v272 = vand.u32 %v47, 4294901760
    %v273 = vsub.f32 %v47, %v272
    %274 = vmatmul.mubr.f32.gmra.mrb[0].mxu0 %v273
    %v275 = vpop.f32.mrb[0].mxu0
    %v276 = vadd.f32 %v202, %v275
    %v277 = vpop.f32.mrb[0].mxu0
    %278 = vdwg.mxu0
    %279 = vmatprep.subr.mxu0 0.0
    %v280 = vand.u32 %v51, 4294901760
    %281 = vmatpush1.msra.mxu0 %v280
    %282 = vmatprep.subr.mxu0 0.0
    %283 = vmatpush1.msra.mxu0 0.0
    %284 = vmatprep.subr.mxu0 0.0
    %285 = vmatpush1.msra.mxu0 0.0
    %286 = vmatprep.subr.mxu0 0.0
    %287 = vmatpush1.msra.mxu0 0.0
    %288 = vmatprep.subr.mxu0 0.0
    %289 = vmatpush1.msra.mxu0 0.0
    %290 = vmatprep.subr.mxu0 0.0
    %291 = vmatpush1.msra.mxu0 0.0
    %292 = vmatprep.subr.mxu0 0.0
    %293 = vmatpush1.msra.mxu0 0.0
    %294 = vmatprep.subr.mxu0 0.0
    %295 = vmatpush1.msra.mxu0 0.0
    %296 = vmatprep.subr.mxu0 0.0
    %297 = vmatpush1.msra.mxu0 0.0
    %298 = vmatprep.subr.mxu0 0.0
    %299 = vmatpush1.msra.mxu0 0.0
    %300 = vmatprep.subr.mxu0 0.0
    %301 = vmatpush1.msra.mxu0 0.0
    %302 = vmatprep.subr.mxu0 0.0
    %303 = vmatpush1.msra.mxu0 0.0
    %304 = vmatprep.subr.mxu0 0.0
    %305 = vmatpush1.msra.mxu0 0.0
    %306 = vmatprep.subr.mxu0 0.0
    %307 = vmatpush1.msra.mxu0 0.0
    %308 = vmatprep.subr.mxu0 0.0
    %309 = vmatpush1.msra.mxu0 0.0
    %310 = vmatprep.subr.mxu0 0.0
    %311 = vmatpush1.msra.mxu0 0.0
    %312 = vmatprep.subr.mxu0 0.0
    %313 = vmatpush1.msra.mxu0 0.0
    %314 = vmatprep.subr.mxu0 0.0
    %315 = vmatpush1.msra.mxu0 0.0
    %316 = vmatprep.subr.mxu0 0.0
    %317 = vmatpush1.msra.mxu0 0.0
    %318 = vmatprep.subr.mxu0 0.0
    %319 = vmatpush1.msra.mxu0 0.0
    %320 = vmatprep.subr.mxu0 0.0
    %321 = vmatpush1.msra.mxu0 0.0
    %322 = vmatprep.subr.mxu0 0.0
    %323 = vmatpush1.msra.mxu0 0.0
    %324 = vmatprep.subr.mxu0 0.0
    %325 = vmatpush1.msra.mxu0 0.0
    %326 = vmatprep.subr.mxu0 0.0
    %327 = vmatpush1.msra.mxu0 0.0
    %328 = vmatprep.subr.mxu0 0.0
    %329 = vmatpush1.msra.mxu0 0.0
    %330 = vmatprep.subr.mxu0 0.0
    %331 = vmatpush1.msra.mxu0 0.0
    %332 = vmatprep.subr.mxu0 0.0
    %333 = vmatpush1.msra.mxu0 0.0
    %334 = vmatprep.subr.mxu0 0.0
    %335 = vmatpush1.msra.mxu0 0.0
    %336 = vmatprep.subr.mxu0 0.0
    %337 = vmatpush1.msra.mxu0 0.0
    %338 = vmatprep.subr.mxu0 0.0
    %339 = vmatpush1.msra.mxu0 0.0
    %340 = vmatprep.subr.mxu0 0.0
    %341 = vmatpush1.msra.mxu0 0.0
    %342 = vmatprep.subr.mxu0 0.0
    %343 = vmatpush1.msra.mxu0 0.0
    %344 = vmatprep.mubr.f32.mxu0 0.0
    %v345 = vand.u32 %v47, 4294901760
    %v346 = vsub.f32 %v47, %v345
    %v347 = vand.u32 %v346, 4294901760
    %348 = vmatmul.mubr.f32.gmra.mrb[0].mxu0 %v347
    %v349 = vpop.f32.mrb[0].mxu0
    %v350 = vadd.f32 %v276, %v349
    %v351 = vpop.f32.mrb[0].mxu0
    %352 = vdwg.mxu0
    %353 = vmatprep.subr.mxu0 0.0
    %v354 = vand.u32 %v51, 4294901760
    %v355 = vsub.f32 %v51, %v354
    %v356 = vand.u32 %v355, 4294901760
    %357 = vmatpush1.msra.mxu0 %v356
    %358 = vmatprep.subr.mxu0 0.0
    %359 = vmatpush1.msra.mxu0 0.0
    %360 = vmatprep.subr.mxu0 0.0
    %361 = vmatpush1.msra.mxu0 0.0
    %362 = vmatprep.subr.mxu0 0.0
    %363 = vmatpush1.msra.mxu0 0.0
    %364 = vmatprep.subr.mxu0 0.0
    %365 = vmatpush1.msra.mxu0 0.0
    %366 = vmatprep.subr.mxu0 0.0
    %367 = vmatpush1.msra.mxu0 0.0
    %368 = vmatprep.subr.mxu0 0.0
    %369 = vmatpush1.msra.mxu0 0.0
    %370 = vmatprep.subr.mxu0 0.0
    %371 = vmatpush1.msra.mxu0 0.0
    %372 = vmatprep.subr.mxu0 0.0
    %373 = vmatpush1.msra.mxu0 0.0
    %374 = vmatprep.subr.mxu0 0.0
    %375 = vmatpush1.msra.mxu0 0.0
    %376 = vmatprep.subr.mxu0 0.0
    %377 = vmatpush1.msra.mxu0 0.0
    %378 = vmatprep.subr.mxu0 0.0
    %379 = vmatpush1.msra.mxu0 0.0
    %380 = vmatprep.subr.mxu0 0.0
    %381 = vmatpush1.msra.mxu0 0.0
    %382 = vmatprep.subr.mxu0 0.0
    %383 = vmatpush1.msra.mxu0 0.0
    %384 = vmatprep.subr.mxu0 0.0
    %385 = vmatpush1.msra.mxu0 0.0
    %386 = vmatprep.subr.mxu0 0.0
    %387 = vmatpush1.msra.mxu0 0.0
    %388 = vmatprep.subr.mxu0 0.0
    %389 = vmatpush1.msra.mxu0 0.0
    %390 = vmatprep.subr.mxu0 0.0
    %391 = vmatpush1.msra.mxu0 0.0
    %392 = vmatprep.subr.mxu0 0.0
    %393 = vmatpush1.msra.mxu0 0.0
    %394 = vmatprep.subr.mxu0 0.0
    %395 = vmatpush1.msra.mxu0 0.0
    %396 = vmatprep.subr.mxu0 0.0
    %397 = vmatpush1.msra.mxu0 0.0
    %398 = vmatprep.subr.mxu0 0.0
    %399 = vmatpush1.msra.mxu0 0.0
    %400 = vmatprep.subr.mxu0 0.0
    %401 = vmatpush1.msra.mxu0 0.0
    %402 = vmatprep.subr.mxu0 0.0
    %403 = vmatpush1.msra.mxu0 0.0
    %404 = vmatprep.subr.mxu0 0.0
    %405 = vmatpush1.msra.mxu0 0.0
    %406 = vmatprep.subr.mxu0 0.0
    %407 = vmatpush1.msra.mxu0 0.0
    %408 = vmatprep.subr.mxu0 0.0
    %409 = vmatpush1.msra.mxu0 0.0
    %410 = vmatprep.subr.mxu0 0.0
    %411 = vmatpush1.msra.mxu0 0.0
    %412 = vmatprep.subr.mxu0 0.0
    %413 = vmatpush1.msra.mxu0 0.0
    %414 = vmatprep.subr.mxu0 0.0
    %415 = vmatpush1.msra.mxu0 0.0
    %416 = vmatprep.subr.mxu0 0.0
    %417 = vmatpush1.msra.mxu0 0.0
    %418 = vmatprep.subr.mxu0 0.0
    %419 = vmatpush1.msra.mxu0 0.0
    %420 = vmatprep.mubr.f32.mxu0 0.0
    %v421 = vand.u32 %v47, 4294901760
    %422 = vmatmul.mubr.f32.gmra.mrb[0].mxu0 %v421
    %v423 = vpop.f32.mrb[0].mxu0
    %v424 = vadd.f32 %v350, %v423
    %v425 = vpop.f32.mrb[0].mxu0
    %426 = vdwg.mxu0
    %427 = vmatprep.subr.mxu0 0.0
    %v428 = vand.u32 %v51, 4294901760
    %429 = vmatpush1.msra.mxu0 %v428
    %430 = vmatprep.subr.mxu0 0.0
    %431 = vmatpush1.msra.mxu0 0.0
    %432 = vmatprep.subr.mxu0 0.0
    %433 = vmatpush1.msra.mxu0 0.0
    %434 = vmatprep.subr.mxu0 0.0
    %435 = vmatpush1.msra.mxu0 0.0
    %436 = vmatprep.subr.mxu0 0.0
    %437 = vmatpush1.msra.mxu0 0.0
    %438 = vmatprep.subr.mxu0 0.0
    %439 = vmatpush1.msra.mxu0 0.0
    %440 = vmatprep.subr.mxu0 0.0
    %441 = vmatpush1.msra.mxu0 0.0
    %442 = vmatprep.subr.mxu0 0.0
    %443 = vmatpush1.msra.mxu0 0.0
    %444 = vmatprep.subr.mxu0 0.0
    %445 = vmatpush1.msra.mxu0 0.0
    %446 = vmatprep.subr.mxu0 0.0
    %447 = vmatpush1.msra.mxu0 0.0
    %448 = vmatprep.subr.mxu0 0.0
    %449 = vmatpush1.msra.mxu0 0.0
    %450 = vmatprep.subr.mxu0 0.0
    %451 = vmatpush1.msra.mxu0 0.0
    %452 = vmatprep.subr.mxu0 0.0
    %453 = vmatpush1.msra.mxu0 0.0
    %454 = vmatprep.subr.mxu0 0.0
    %455 = vmatpush1.msra.mxu0 0.0
    %456 = vmatprep.subr.mxu0 0.0
    %457 = vmatpush1.msra.mxu0 0.0
    %458 = vmatprep.subr.mxu0 0.0
    %459 = vmatpush1.msra.mxu0 0.0
    %460 = vmatprep.subr.mxu0 0.0
    %461 = vmatpush1.msra.mxu0 0.0
    %462 = vmatprep.subr.mxu0 0.0
    %463 = vmatpush1.msra.mxu0 0.0
    %464 = vmatprep.subr.mxu0 0.0
    %465 = vmatpush1.msra.mxu0 0.0
    %466 = vmatprep.subr.mxu0 0.0
    %467 = vmatpush1.msra.mxu0 0.0
    %468 = vmatprep.subr.mxu0 0.0
    %469 = vmatpush1.msra.mxu0 0.0
    %470 = vmatprep.subr.mxu0 0.0
    %471 = vmatpush1.msra.mxu0 0.0
    %472 = vmatprep.subr.mxu0 0.0
    %473 = vmatpush1.msra.mxu0 0.0
    %474 = vmatprep.subr.mxu0 0.0
    %475 = vmatpush1.msra.mxu0 0.0
    %476 = vmatprep.subr.mxu0 0.0
    %477 = vmatpush1.msra.mxu0 0.0
    %478 = vmatprep.subr.mxu0 0.0
    %479 = vmatpush1.msra.mxu0 0.0
    %480 = vmatprep.subr.mxu0 0.0
    %481 = vmatpush1.msra.mxu0 0.0
    %482 = vmatprep.subr.mxu0 0.0
    %483 = vmatpush1.msra.mxu0 0.0
    %484 = vmatprep.subr.mxu0 0.0
    %485 = vmatpush1.msra.mxu0 0.0
    %486 = vmatprep.subr.mxu0 0.0
    %487 = vmatpush1.msra.mxu0 0.0
    %488 = vmatprep.subr.mxu0 0.0
    %489 = vmatpush1.msra.mxu0 0.0
    %490 = vmatprep.subr.mxu0 0.0
    %491 = vmatpush1.msra.mxu0 0.0
    %492 = vmatprep.mubr.f32.mxu0 0.0
    %v493 = vand.u32 %v47, 4294901760
    %494 = vmatmul.mubr.f32.gmra.mrb[0].mxu0 %v493
    %v495 = vpop.f32.mrb[0].mxu0
    %v496 = vadd.f32 %v424, %v495
    %v497 = vpop.f32.mrb[0].mxu0
    %498 = vdwg.mxu0
    %v499 = vld [vmem:[%s2] sm:$0x1]
    %v501 = vlaneseq
    %v502 = vshrl.u32 %v501, 7
    %v503 = vsub.s32 0, %v502
    %v504 = vrot.slane %v499, %v503
    %v506 = vmul.f32 %v496, %v504
    %v507 = vld [vmem:[%s3] sm:$0x1]
    %v509 = vlaneseq
    %v510 = vshrl.u32 %v509, 7
    %v511 = vsub.s32 0, %v510
    %v512 = vrot.slane %v507, %v511
    %v514 = vadd.f32 %v506, %v512
    %v515 = vand.u32 2147483647, %v514
    %vm516 = vcmp.le.f32.partialorder %v515, 0.7853982
    %vm517 = vcmp.lt.s32.totalorder %v514, 0
    %v518 = vand.u32 %v514, 2139095040
    %v519 = vshrl.u32 %v518, 23
    %v520 = vsub.s32 %v519, 127
    %v521 = vand.u32 2147483647, %v514
    %v522 = vand.u32 %v521, 8388607
    %v523 = vor.u32 %v522, 8388608
    %v524 = vsub.s32 0, %v523
    %v525 = vadd.s32 %v520, 1
    %vm526 = vcmp.gt.s32.totalorder %v525, 0
    %v527 = vsel %vm526, %v525, 0
    %v528 = vshrl.u32 %v527, 5
    %v529 = vand.u32 %v527, 31
    %v530 = vsub.s32 32, %v529
    %v531 = vshrl.u32 683565275, %v530
    %v532 = vshll.u32 683565275, %v529
    %v533 = vshrl.u32 2475754826, %v530
    %v534 = vor.u32 %v532, %v533
    %v535 = vshll.u32 2475754826, %v529
    %v536 = vshrl.u32 2131351028, %v530
    %v537 = vor.u32 %v535, %v536
    %v538 = vshll.u32 2131351028, %v529
    %v539 = vshrl.u32 2102212464, %v530
    %v540 = vor.u32 %v538, %v539
    %v541 = vshll.u32 2102212464, %v529
    %v542 = vshrl.u32 920167782, %v530
    %v543 = vor.u32 %v541, %v542
    %v544 = vshll.u32 920167782, %v529
    %v545 = vshrl.u32 1326507024, %v530
    %v546 = vor.u32 %v544, %v545
    %vm547 = vcmp.lt.s32.totalorder %v528, 1
    %vm548 = vcmp.lt.s32.totalorder %v528, 2
    %vm549 = vcmp.lt.s32.totalorder %v528, 3
    %vm550 = vcmp.lt.s32.totalorder %v528, 4
    %v551 = vsel %vm547, %v531, %v534
    %v552 = vsel %vm550, %v540, 2102212464
    %v553 = vsel %vm549, %v537, %v552
    %v554 = vsel %vm548, %v551, %v553
    %v555 = vsel %vm547, %v534, %v537
    %v556 = vsel %vm550, %v543, 920167782
    %v557 = vsel %vm549, %v540, %v556
    %v558 = vsel %vm548, %v555, %v557
    %v559 = vsel %vm547, %v537, %v540
    %v560 = vsel %vm550, %v546, 1326507024
    %v561 = vsel %vm549, %v543, %v560
    %v562 = vsel %vm548, %v559, %v561
    %v563 = vshll.u32 %v523, 8
    %v564 = vmul.u32.u64.compose %v563, %v562
    %v565 = vextract.low.u32 %v564
    %v566 = vextract.high.u32 %v564
    %v567 = vmul.u32.u64.compose %v563, %v558
    %v568 = vextract.low.u32 %v567
    %v569 = vextract.high.u32 %v567
    %v570 = vmul.u32 %v563, %v554
    %v571 = vadd.s32 %v566, %v568
    %vm572 = vc.u32 %v566, %v568
    %v573 = vadd.s32 %v569, 1
    %v574 = vsel %vm572, %v573, %v569
    %v575 = vadd.s32 %v570, %v574
    %v576 = vadd.s32 %v575, 536870912
    %v577 = vshrl.u32 %v576, 30
    %v578 = vshll.u32 %v577, 30
    %v579 = vsub.s32 %v575, %v578
    %vm580 = vcmp.lt.s32.totalorder %v579, 0
    %v581 = vsub.s32 0, %v579
    %v582 = vsel %vm580, %v581, %v579
    %v583 = vclz %v582
    %v584 = vsub.s32 %v583, 2
    %vm585 = vcmp.gt.s32.totalorder 0, %v584
    %v586 = vsel %vm585, 0, %v584
    %v587 = vsub.s32 32, %v586
    %v588 = vshll.u32 %v579, %v586
    %v589 = vshrl.u32 %v571, %v587
    %v590 = vor.u32 %v588, %v589
    %v591 = vsub.s32 4294967266, %v586
    %v592 = vadd.s32 %v591, 127
    %v593 = vshll.u32 %v592, 23
    %v594 = vor.u32 4788187, %v593
    %v595 = vand.u32 2147483647, %v594
    %v597 = vcvt.s32.f32 %v590
    %v598 = vmul.f32 %v597, %v595
    %v599 = vxor.u32 %v598, 2147483648
    %v600 = vsel %vm517, %v599, %v598
    %v601 = vsub.s32 4, %v577
    %v602 = vsel %vm517, %v601, %v577
    %v603 = vsel %vm516, %v514, %v600
    %v604 = vsel %vm516, 0, %v602
    %v605 = vcosq.f32.pop %v603
    %v606 = vsinq.f32.pop %v603
    %vm607 = vweird.f32 %v514
    %v608 = vadd.s32 %v604, 3
    %v609 = vand.u32 %v608, 3
    %vm610 = vcmp.lt.s32.totalorder %v609, 2
    %vm611 = vcmp.eq.s32.totalorder %v609, 0
    %v612 = vxor.u32 %v606, 2147483648
    %v613 = vsel %vm611, %v605, %v612
    %vm614 = vcmp.eq.s32.totalorder %v609, 2
    %v615 = vxor.u32 %v605, 2147483648
    %v616 = vsel %vm614, %v615, %v606
    %v617 = vsel %vm610, %v613, %v616
    %v618 = vsel %vm607, nan, %v617
    %619 = vst [vmem:[#allocation7] sm:$0x3] %v618
    // Predicated region
    $region26: #{tpu_custom_call.1} parent=1 // pred_check
      _
    $region27: #{tpu_custom_call.1} parent=1 // pred_check_branch
      %621 = sbr.rel (0) target = $region29
    $region28: #{tpu_custom_call.1} parent=1 // pred_region
      %s623 = ssub.s32 32, 32
      %624 = vsyncadd [#allocation4], %s623
      %s626 = sshll.u32 [#allocation7], 4
      %s627 = int_to_ptr.vmem [resolvable:$true] %s626
      %629 = dma.vmem_to_hbm [thread:$0]  %s627, 32, %s4, [#allocation4]
    $region29: #{tpu_custom_call.1} parent=1 // pred_fallthru
      _
    // Predicated region
    $region30: #{tpu_custom_call.1} parent=1 // pred_check
      _
    $region31: #{tpu_custom_call.1} parent=1 // pred_check_branch
      %631 = sbr.rel (0) target = $region33
    $region32: #{tpu_custom_call.1} parent=1 // pred_region
      %632 = dma.done [#allocation4], 32
    $region33: #{tpu_custom_call.1} parent=1 // pred_fallthru
      _
    %633 = vsyncpa [#allocation3], 1
    %634 = vsyncpa [#allocation6], 1
    %635 = vsyncpa [#allocation4], 1

</llo_original>
